<compile_context>
chip_gen: v5e
topology: v5e:2x2
jax: 0.10.0
libtpu: 0.0.40
codegen_flags: <defaults>
</compile_context>

<pallas_src>
import jax
import jax.numpy as jnp
from jax.experimental import pallas as pl
from jax.experimental.pallas import tpu as pltpu

DIM = 128          # model dim (module default)
LN_EPS = 1e-5      # torch.nn.LayerNorm default
SCALE = DIM ** (-0.5)
NEG_BIG = -1e30    # masked-key logit (exp underflows to exactly 0)


def _round_up(x, m):
    return (x + m - 1) // m * m


def _cdiv(a, b):
    return -(-a // b)


def _layernorm(x, gamma, beta):
    # single pass: var = E[x^2] - E[x]^2, clamped against cancellation
    mu = jnp.mean(x, axis=-1, keepdims=True)
    ms = jnp.mean(x * x, axis=-1, keepdims=True)
    var = jnp.maximum(ms - mu * mu, 0.0)
    return (x - mu) * jax.lax.rsqrt(var + LN_EPS) * gamma + beta


def _kv_kernel(z2_ref, g2_ref, be2_ref, wb_ref, bb_ref, kv_ref):
    z2n = _layernorm(z2_ref[...], g2_ref[...], be2_ref[...])
    kv_ref[...] = (jnp.dot(z2n, wb_ref[...], preferred_element_type=jnp.float32)
                   + bb_ref[...])


def _compute_kv(z2p, g2, b2, wb, bb):
    n2_pad, d = z2p.shape
    tkv = 256 if n2_pad % 256 == 0 else 128
    tkv = min(tkv, n2_pad)
    return pl.pallas_call(
        _kv_kernel,
        out_shape=jax.ShapeDtypeStruct((n2_pad, 2 * d), jnp.float32),
        grid_spec=pltpu.PrefetchScalarGridSpec(
            num_scalar_prefetch=0,
            grid=(n2_pad // tkv,),
            in_specs=[
                pl.BlockSpec((tkv, d), lambda i: (i, 0)),
                pl.BlockSpec((1, d), lambda i: (0, 0),
                             pipeline_mode=pl.Buffered(1)),
                pl.BlockSpec((1, d), lambda i: (0, 0),
                             pipeline_mode=pl.Buffered(1)),
                pl.BlockSpec((d, 2 * d), lambda i: (0, 0),
                             pipeline_mode=pl.Buffered(1)),
                pl.BlockSpec((1, 2 * d), lambda i: (0, 0),
                             pipeline_mode=pl.Buffered(1)),
            ],
            out_specs=pl.BlockSpec((tkv, 2 * d), lambda i: (i, 0)),
        ),
        compiler_params=pltpu.CompilerParams(
            dimension_semantics=("arbitrary",),
        ),
    )(z2p, g2, b2, wb, bb)


def cross_attn_forward(z1, z2, params):
    n1, d = z1.shape
    n2, _ = z2.shape
    assert d == DIM

    # --- tiling / padding (lane-dense attn output, (8,128)-aligned blocks) ---
    n2_pad = _round_up(n2, 128)                       # lane-dense last dim
    # query tile: as tall as the attn-tile VMEM cost allows (<= ~8 MiB / tile)
    tq_cap = max(8, min(512, (8 << 20) // (n2_pad * 8)))
    tq_cap = (tq_cap // 8) * 8
    tq = min(tq_cap, _round_up(n1, 8))
    q_tiles = _cdiv(n1, tq)
    n_partials = 2 if q_tiles >= 2 else 1             # per-core c_z partials (v7x)
    q_tiles_inner = _cdiv(q_tiles, n_partials)
    n1_pad = tq * q_tiles_inner * n_partials

    z1p = jnp.pad(z1, ((0, n1_pad - n1), (0, 0))) if n1_pad != n1 else z1
    z2p = jnp.pad(z2, ((0, n2_pad - n2), (0, 0))) if n2_pad != n2 else z2

    # --- fuse projection weights; fold softmax scale into wq/bq -------------
    wa = jnp.concatenate([params["wq"] * SCALE, params["wv2"]], axis=1)  # (D, 2D)
    ba = jnp.concatenate([params["bq"] * SCALE, params["bv2"]], axis=1)  # (1, 2D)
    wb = jnp.concatenate([params["wk"], params["wv1"]], axis=1)          # (D, 2D)
    bb = jnp.concatenate([params["bk"], params["bv1"]], axis=1)          # (1, 2D)

    # additive key-column mask (0 for real keys, -1e30 for padded columns)
    col = jnp.arange(n2_pad)[None, :]
    key_bias = jnp.where(col < n2, 0.0, NEG_BIG).astype(jnp.float32)     # (1, N2p)

    # precompute key/value side once (tiny one-shot kernel)
    kv = _compute_kv(z2p, params["g2"], params["b2"], wb, bb)            # (N2p, 2D)

    mask_cols = n2_pad != n2
    mask_rows = n1_pad != n1

    def kernel(z1_ref, kv_ref, bias_ref, g1_ref, be1_ref, wa_ref, ba_ref,
               zc_ref, czt_ref, attn_ref):
        p = pl.program_id(0)
        j = pl.program_id(1)

        @pl.when(j == 0)
        def _():
            czt_ref[...] = jnp.zeros_like(czt_ref)

        # Query side: one fused 256-wide projection (q pre-scaled by 1/sqrt(D)).
        z1n = _layernorm(z1_ref[...], g1_ref[...], be1_ref[...])
        qa = (jnp.dot(z1n, wa_ref[...], preferred_element_type=jnp.float32)
              + ba_ref[...])
        q = qa[:, :DIM]
        v1 = qa[:, DIM:]

        # Lane-aligned slices of the kv block: no full (N2p, 2D) materialize.
        k = kv_ref[:, :DIM]
        v = kv_ref[:, DIM:]

        # sim = q @ k^T (contraction folded into dot_general -> no k transpose)
        sim = jax.lax.dot_general(
            q, k, (((1,), (1,)), ((), ())),
            preferred_element_type=jnp.float32)
        if mask_cols:                 # padded key columns -> attn exactly 0
            sim = sim + bias_ref[...]

        m = jnp.max(sim, axis=-1, keepdims=True)
        e = jnp.exp(sim - m)
        l = jnp.sum(e, axis=-1, keepdims=True)
        attn = e / l                  # exact: attn is a returned module output

        attn_ref[...] = attn                                  # lane-dense store
        zc_ref[...] = jnp.dot(attn, v, preferred_element_type=jnp.float32)

        # c_z accumulated transposed: czt += v1^T @ attn -> (D, N2p).
        # Only the small (tq, D) operand ever needs a transpose, never attn.
        attn_cz = attn
        if mask_rows:                 # padded query rows must not pollute c_z
            row = ((p * q_tiles_inner + j) * tq
                   + jax.lax.broadcasted_iota(jnp.int32, attn.shape, 0))
            attn_cz = jnp.where(row < n1, attn, 0.0)
        czt_ref[...] += jax.lax.dot_general(
            v1, attn_cz, (((0,), (0,)), ((), ())),
            preferred_element_type=jnp.float32)

    buf1 = pl.Buffered(1)  # constant-index inputs: second pipeline buffer is dead
    in_specs = [
        pl.BlockSpec((tq, d), lambda p, j: (p * q_tiles_inner + j, 0)),   # z1 tile
        pl.BlockSpec((n2_pad, 2 * d), lambda p, j: (0, 0),
                     pipeline_mode=buf1),                                 # kv
        pl.BlockSpec((1, n2_pad), lambda p, j: (0, 0),
                     pipeline_mode=buf1),                                 # key mask
        pl.BlockSpec((1, d), lambda p, j: (0, 0), pipeline_mode=buf1),    # norm1 g
        pl.BlockSpec((1, d), lambda p, j: (0, 0), pipeline_mode=buf1),    # norm1 b
        pl.BlockSpec((d, 2 * d), lambda p, j: (0, 0),
                     pipeline_mode=buf1),                                 # [wq|wv2]
        pl.BlockSpec((1, 2 * d), lambda p, j: (0, 0),
                     pipeline_mode=buf1),                                 # [bq|bv2]
    ]
    out_specs = (
        pl.BlockSpec((tq, d), lambda p, j: (p * q_tiles_inner + j, 0)),   # z_c
        pl.BlockSpec((d, n2_pad), lambda p, j: (p, 0)),                   # czt part.
        pl.BlockSpec((tq, n2_pad), lambda p, j: (p * q_tiles_inner + j, 0)),  # attn
    )
    out_shapes = (
        jax.ShapeDtypeStruct((n1_pad, d), jnp.float32),
        jax.ShapeDtypeStruct((n_partials * d, n2_pad), jnp.float32),
        jax.ShapeDtypeStruct((n1_pad, n2_pad), jnp.float32),
    )

    # Explicit VMEM budget: resident set estimate x2 headroom, clamped to a
    # range that is safe on every generation (v7x physical VMEM is 64 MiB).
    est = (2 * tq * d * 4                # z1 tile (double-buffered)
           + n2_pad * 2 * d * 4          # kv (single-buffered)
           + n2_pad * 4                  # key mask row
           + (d * 2 * d + 2 * d) * 4     # fused weights + bias
           + 4 * d * 4 * 8               # gammas/betas (padded)
           + 2 * tq * d * 4              # z_c tile
           + 2 * tq * n2_pad * 4         # attn tile
           + 2 * d * n2_pad * 4)         # czt accumulator
    vmem_limit = int(min(max(2 * est, 32 << 20), 48 << 20))

    z_c, czt, attn = pl.pallas_call(
        kernel,
        out_shape=out_shapes,
        grid_spec=pltpu.PrefetchScalarGridSpec(
            num_scalar_prefetch=0,
            grid=(n_partials, q_tiles_inner),
            in_specs=in_specs,
            out_specs=out_specs,
        ),
        # Leading partial axis is "parallel" (each core owns its own czt
        # block, init'd at j==0); inner query axis is "arbitrary" because
        # czt is a resident accumulator across it.
        compiler_params=pltpu.CompilerParams(
            dimension_semantics=("parallel", "arbitrary"),
            vmem_limit_bytes=vmem_limit,
        ),
    )(z1p, kv, key_bias, params["g1"], params["b1"], wa, ba)

    if n_partials > 1:
        czt = czt.reshape(n_partials, d, n2_pad).sum(axis=0)
    c_z = czt.T[:n2]                    # (N2, D) = attn^T @ v1
    return z_c[:n1], c_z, attn[:n1, :n2]


def make_params(key):
    ks = jax.random.split(key, 8)

    def lin(k):
        kw, kb = jax.random.split(k)
        w = jax.random.normal(kw, (DIM, DIM), jnp.float32) * 0.02  # (in, out)
        b = jax.random.normal(kb, (1, DIM), jnp.float32) * 0.01
        return w, b

    wq, bq = lin(ks[0])
    wk, bk = lin(ks[1])
    wv1, bv1 = lin(ks[2])
    wv2, bv2 = lin(ks[3])
    return dict(
        wq=wq, bq=bq, wk=wk, bk=bk, wv1=wv1, bv1=bv1, wv2=wv2, bv2=bv2,
        g1=jnp.ones((1, DIM), jnp.float32), b1=jnp.zeros((1, DIM), jnp.float32),
        g2=jnp.ones((1, DIM), jnp.float32), b2=jnp.zeros((1, DIM), jnp.float32),
    )


def reference_forward(z1, z2, p):
    def ln(x, g, b):
        mu = jnp.mean(x, axis=-1, keepdims=True)
        var = jnp.mean((x - mu) ** 2, axis=-1, keepdims=True)
        return (x - mu) * jax.lax.rsqrt(var + LN_EPS) * g + b

    z1n = ln(z1, p["g1"], p["b1"])
    z2n = ln(z2, p["g2"], p["b2"])
    q = z1n @ p["wq"] + p["bq"]
    k = z2n @ p["wk"] + p["bk"]
    v = z2n @ p["wv1"] + p["bv1"]
    v1 = z1n @ p["wv2"] + p["bv2"]
    sim = q @ k.T * SCALE
    attn = jax.nn.softmax(sim, axis=-1)
    return attn @ v, attn.T @ v1, attn


if __name__ == "__main__":
    key = jax.random.PRNGKey(0)
    kp, k1, k2 = jax.random.split(key, 3)

    n1, n2 = 8, 16   # sequence lengths of z1 / z2
    params = make_params(kp)
    z1 = jax.random.normal(k1, (n1, DIM), jnp.float32)
    z2 = jax.random.normal(k2, (n2, DIM), jnp.float32)

    z_c, c_z, attn = cross_attn_forward(z1, z2, params)
    jax.block_until_ready((z_c, c_z, attn))

    # numerical sanity check against plain-JAX reference
    zr, cr, ar = reference_forward(z1, z2, params)
    assert z_c.shape == (n1, DIM) and c_z.shape == (n2, DIM) and attn.shape == (n1, n2)
    assert jnp.allclose(z_c, zr, atol=1e-4, rtol=1e-4)
    assert jnp.allclose(c_z, cr, atol=1e-4, rtol=1e-4)
    assert jnp.allclose(attn, ar, atol=5e-5, rtol=1e-4)

    print("KERNEL_OK")
</pallas_src>

<mosaic_0001>
module attributes {stable_mosaic.version = 11 : i64} {
  func.func @_kv_kernel(%arg0: i32, %arg1: memref<128x128xf32, #tpu.memory_space<vmem>>, %arg2: memref<1x128xf32, #tpu.memory_space<vmem>>, %arg3: memref<1x128xf32, #tpu.memory_space<vmem>>, %arg4: memref<128x256xf32, #tpu.memory_space<vmem>>, %arg5: memref<1x256xf32, #tpu.memory_space<vmem>>, %arg6: memref<128x256xf32, #tpu.memory_space<vmem>>) attributes {dimension_semantics = [#tpu.dimension_semantics<arbitrary>], iteration_bounds = array<i64: 1>, scalar_prefetch = 0 : i64, scratch_operands = 0 : i64, tpu.core_type = #tpu.core_type<tc>, window_params = [{transform_indices = @transform_0, window_bounds = array<i64: 128, 128>}, {pipeline_mode = #tpu.pipeline_mode<synchronous>, transform_indices = @transform_1, window_bounds = array<i64: 1, 128>}, {pipeline_mode = #tpu.pipeline_mode<synchronous>, transform_indices = @transform_2, window_bounds = array<i64: 1, 128>}, {pipeline_mode = #tpu.pipeline_mode<synchronous>, transform_indices = @transform_3, window_bounds = array<i64: 128, 256>}, {pipeline_mode = #tpu.pipeline_mode<synchronous>, transform_indices = @transform_4, window_bounds = array<i64: 1, 256>}, {transform_indices = @transform_5, window_bounds = array<i64: 128, 256>}]} {
    %c0 = arith.constant 0 : index
    %c0_0 = arith.constant 0 : index
    %0 = vector.load %arg1[%c0, %c0_0] : memref<128x128xf32, #tpu.memory_space<vmem>>, vector<128x128xf32>
    %c0_1 = arith.constant 0 : index
    %c0_2 = arith.constant 0 : index
    %1 = vector.load %arg2[%c0_1, %c0_2] : memref<1x128xf32, #tpu.memory_space<vmem>>, vector<1x128xf32>
    %c0_3 = arith.constant 0 : index
    %c0_4 = arith.constant 0 : index
    %2 = vector.load %arg3[%c0_3, %c0_4] : memref<1x128xf32, #tpu.memory_space<vmem>>, vector<1x128xf32>
    %cst = arith.constant dense<0.000000e+00> : vector<128xf32>
    %3 = vector.multi_reduction <add>, %0, %cst [1] : vector<128x128xf32> to vector<128xf32>
    %4 = vector.shape_cast %3 : vector<128xf32> to vector<128x1xf32>
    %cst_5 = arith.constant 1.280000e+02 : f32
    %5 = vector.broadcast %cst_5 : f32 to vector<128x1xf32>
    %6 = arith.divf %4, %5 : vector<128x1xf32>
    %7 = arith.mulf %0, %0 : vector<128x128xf32>
    %cst_6 = arith.constant dense<0.000000e+00> : vector<128xf32>
    %8 = vector.multi_reduction <add>, %7, %cst_6 [1] : vector<128x128xf32> to vector<128xf32>
    %9 = vector.shape_cast %8 : vector<128xf32> to vector<128x1xf32>
    %cst_7 = arith.constant 1.280000e+02 : f32
    %10 = vector.broadcast %cst_7 : f32 to vector<128x1xf32>
    %11 = arith.divf %9, %10 : vector<128x1xf32>
    %12 = arith.mulf %6, %6 : vector<128x1xf32>
    %13 = arith.subf %11, %12 : vector<128x1xf32>
    %cst_8 = arith.constant 0.000000e+00 : f32
    %14 = vector.broadcast %cst_8 : f32 to vector<128x1xf32>
    %15 = arith.maximumf %13, %14 : vector<128x1xf32>
    %16 = vector.broadcast %6 : vector<128x1xf32> to vector<128x128xf32>
    %17 = arith.subf %0, %16 : vector<128x128xf32>
    %cst_9 = arith.constant 9.99999974E-6 : f32
    %18 = vector.broadcast %cst_9 : f32 to vector<128x1xf32>
    %19 = arith.addf %15, %18 : vector<128x1xf32>
    %20 = math.rsqrt %19 : vector<128x1xf32>
    %21 = vector.broadcast %20 : vector<128x1xf32> to vector<128x128xf32>
    %22 = arith.mulf %17, %21 : vector<128x128xf32>
    %23 = vector.broadcast %1 : vector<1x128xf32> to vector<128x128xf32>
    %24 = arith.mulf %22, %23 : vector<128x128xf32>
    %25 = vector.broadcast %2 : vector<1x128xf32> to vector<128x128xf32>
    %26 = arith.addf %24, %25 : vector<128x128xf32>
    %c0_10 = arith.constant 0 : index
    %c0_11 = arith.constant 0 : index
    %27 = vector.load %arg4[%c0_10, %c0_11] : memref<128x256xf32, #tpu.memory_space<vmem>>, vector<128x256xf32>
    %cst_12 = arith.constant dense<0.000000e+00> : vector<128x256xf32>
    %28 = tpu.matmul %26, %27, %cst_12 {dimension_numbers = #tpu.dot_dimension_numbers<[1], [0], [0], [1], [0, 0, 1, 1], [], []>} : vector<128x128xf32>, vector<128x256xf32>, vector<128x256xf32> -> vector<128x256xf32>
    %c0_13 = arith.constant 0 : index
    %c0_14 = arith.constant 0 : index
    %29 = vector.load %arg5[%c0_13, %c0_14] : memref<1x256xf32, #tpu.memory_space<vmem>>, vector<1x256xf32>
    %30 = vector.broadcast %29 : vector<1x256xf32> to vector<128x256xf32>
    %31 = arith.addf %28, %30 : vector<128x256xf32>
    %c0_15 = arith.constant 0 : index
    %c0_16 = arith.constant 0 : index
    %32 = vector.load %arg6[%c0_15, %c0_16] : memref<128x256xf32, #tpu.memory_space<vmem>>, vector<128x256xf32>
    tpu.vector_store %arg6[%c0_15, %c0_16], %31 {strides = array<i32>} : memref<128x256xf32, #tpu.memory_space<vmem>>, vector<128x256xf32>,
    return
  }
  func.func @transform_0(%arg0: i32) -> (i32, i32) {
    %c0_i32 = arith.constant 0 : i32
    %c0_i32_0 = arith.constant 0 : i32
    return %arg0, %c0_i32 : i32, i32
  }
  func.func @transform_1(%arg0: i32) -> (i32, i32) {
    %c0_i32 = arith.constant 0 : i32
    %c0_i32_0 = arith.constant 0 : i32
    %c0_i32_1 = arith.constant 0 : i32
    return %c0_i32, %c0_i32_0 : i32, i32
  }
  func.func @transform_2(%arg0: i32) -> (i32, i32) {
    %c0_i32 = arith.constant 0 : i32
    %c0_i32_0 = arith.constant 0 : i32
    %c0_i32_1 = arith.constant 0 : i32
    return %c0_i32, %c0_i32_0 : i32, i32
  }
  func.func @transform_3(%arg0: i32) -> (i32, i32) {
    %c0_i32 = arith.constant 0 : i32
    %c0_i32_0 = arith.constant 0 : i32
    %c0_i32_1 = arith.constant 0 : i32
    return %c0_i32, %c0_i32_0 : i32, i32
  }
  func.func @transform_4(%arg0: i32) -> (i32, i32) {
    %c0_i32 = arith.constant 0 : i32
    %c0_i32_0 = arith.constant 0 : i32
    %c0_i32_1 = arith.constant 0 : i32
    return %c0_i32, %c0_i32_0 : i32, i32
  }
  func.func @transform_5(%arg0: i32) -> (i32, i32) {
    %c0_i32 = arith.constant 0 : i32
    %c0_i32_0 = arith.constant 0 : i32
    return %arg0, %c0_i32 : i32, i32
  }
}

</mosaic_0001>

<llo_original>
// kernel: tpu_custom_call.1
$region0: #{tpu_custom_call.1}
  #allocation0 [shape = 'u32[]', space=smem, size = 0x4, offset = 0x4, fixed_abs, tag = 'smem constant byte address 0x4 - core index']
  #allocation1 [shape = 'u32[72,128]{1,0:T(1,128)}', space=vmem, size = 0x9000, scoped, tag = 'internal scratch']
  %s0 = inlined_call_operand.hbm [shape: f32[128,128], index: 0, kind: input, shape index: {}]
  %s1 = inlined_call_operand.hbm [shape: f32[1,128], index: 1, kind: input, shape index: {}]
  %s2 = inlined_call_operand.vmem [shape: f32[1,128], index: 2, kind: input, shape index: {}]
  %s3 = inlined_call_operand.hbm [shape: f32[128,256], index: 3, kind: input, shape index: {}]
  %s4 = inlined_call_operand.vmem [shape: f32[1,256], index: 4, kind: input, shape index: {}]
  %s5 = inlined_call_operand.hbm [shape: f32[128,256], index: 5, kind: output, shape index: {}]
  %s6 = sld [smem:[#allocation0]]
  $region42: #{tpu_custom_call.1} parent=0
    _
  %s8 = ssub.s32 1, %s6
  %s9 = scalar_select 0, %s8, %s6
  $region1: #{tpu_custom_call.1} parent=0
    #allocation2 [shape = 'u8[65536]{0}', space=vmem, size = 0x10000, scoped, tag = 'input window, operand 0, single buffered']
    #allocation3 [shape = 's32[1]{0}', space=sflag, size = 0x4, scoped, tag = 'scoped memory for tpu_custom_call.1']
    #allocation4 [shape = 's32[1]{0}', space=sflag, size = 0x4, scoped, tag = 'scoped memory for tpu_custom_call.1']
    #allocation5 [shape = 'u8[512]{0}', space=vmem, size = 0x400, scoped, tag = 'input window, operand 1, single buffered']
    #allocation6 [shape = 's32[1]{0}', space=sflag, size = 0x4, scoped, tag = 'scoped memory for tpu_custom_call.1']
    #allocation7 [shape = 'u8[131072]{0}', space=vmem, size = 0x20000, scoped, tag = 'input window, operand 3, single buffered']
    #allocation8 [shape = 'u8[131072]{0}', space=vmem, size = 0x20000, scoped, tag = 'output window, operand 0, single buffered']
    %10 = vsyncpa [#allocation3], 0
    %11 = vsyncpa [#allocation6], 0
    %12 = vsyncpa [#allocation4], 0
    // Predicated region
    $region2: #{tpu_custom_call.1} parent=1 // pred_check
      _
    $region3: #{tpu_custom_call.1} parent=1 // pred_check_branch
      %14 = sbr.rel (0) target = $region5
    $region4: #{tpu_custom_call.1} parent=1 // pred_region
      %16 = vsyncadd [#allocation3], 0
      %s17 = sshll.u32 %s0, 4
      %s18 = int_to_ptr.hbm [resolvable:$true] %s17
      %s19 = sshll.u32 [#allocation2], 4
      %s20 = int_to_ptr.vmem [resolvable:$true] %s19
      %25 = dma.hbm_to_vmem [thread:$0]  %s18, 2048, %s20, [#allocation3], 128, 128, 8
    $region5: #{tpu_custom_call.1} parent=1 // pred_fallthru
      _
    // Predicated region
    $region6: #{tpu_custom_call.1} parent=1 // pred_check
      _
    $region7: #{tpu_custom_call.1} parent=1 // pred_check_branch
      %27 = sbr.rel (0) target = $region9
    $region8: #{tpu_custom_call.1} parent=1 // pred_region
      %29 = vsyncadd [#allocation6], 0
      %s31 = sshll.u32 %s1, 4
      %s32 = int_to_ptr.hbm [resolvable:$true] %s31
      %s33 = sshll.u32 [#allocation5], 4
      %s34 = int_to_ptr.vmem [resolvable:$true] %s33
      %36 = dma.hbm_to_vmem [thread:$0]  %s32, 16, %s34, [#allocation6]
    $region9: #{tpu_custom_call.1} parent=1 // pred_fallthru
      _
    // Predicated region
    $region10: #{tpu_custom_call.1} parent=1 // pred_check
      _
    $region11: #{tpu_custom_call.1} parent=1 // pred_check_branch
      %38 = sbr.rel (0) target = $region13
    $region12: #{tpu_custom_call.1} parent=1 // pred_region
      _
    $region13: #{tpu_custom_call.1} parent=1 // pred_fallthru
      _
    // Predicated region
    $region14: #{tpu_custom_call.1} parent=1 // pred_check
      _
    $region15: #{tpu_custom_call.1} parent=1 // pred_check_branch
      %40 = sbr.rel (0) target = $region17
    $region16: #{tpu_custom_call.1} parent=1 // pred_region
      %42 = vsyncadd [#allocation6], 0
      %s43 = sshll.u32 %s3, 4
      %s44 = int_to_ptr.hbm [resolvable:$true] %s43
      %s45 = sshll.u32 [#allocation7], 4
      %s46 = int_to_ptr.vmem [resolvable:$true] %s45
      %51 = dma.hbm_to_vmem [thread:$0]  %s44, 4096, %s46, [#allocation6], 256, 256, 16
    $region17: #{tpu_custom_call.1} parent=1 // pred_fallthru
      _
    // Predicated region
    $region18: #{tpu_custom_call.1} parent=1 // pred_check
      _
    $region19: #{tpu_custom_call.1} parent=1 // pred_check_branch
      %53 = sbr.rel (0) target = $region21
    $region20: #{tpu_custom_call.1} parent=1 // pred_region
      _
    $region21: #{tpu_custom_call.1} parent=1 // pred_fallthru
      _
    // Predicated region
    $region22: #{tpu_custom_call.1} parent=1 // pred_check
      _
    $region23: #{tpu_custom_call.1} parent=1 // pred_check_branch
      %55 = sbr.rel (0) target = $region25
    $region24: #{tpu_custom_call.1} parent=1 // pred_region
      %57 = dma.done [#allocation3], 2048
    $region25: #{tpu_custom_call.1} parent=1 // pred_fallthru
      _
    // Predicated region
    $region26: #{tpu_custom_call.1} parent=1 // pred_check
      _
    $region27: #{tpu_custom_call.1} parent=1 // pred_check_branch
      %59 = sbr.rel (0) target = $region29
    $region28: #{tpu_custom_call.1} parent=1 // pred_region
      %61 = dma.done [#allocation6], 16
    $region29: #{tpu_custom_call.1} parent=1 // pred_fallthru
      _
    // Predicated region
    $region30: #{tpu_custom_call.1} parent=1 // pred_check
      _
    $region31: #{tpu_custom_call.1} parent=1 // pred_check_branch
      %63 = sbr.rel (0) target = $region33
    $region32: #{tpu_custom_call.1} parent=1 // pred_region
      %65 = dma.done [#allocation6], 4096
    $region33: #{tpu_custom_call.1} parent=1 // pred_fallthru
      _
    %v66 = vld [vmem:[#allocation2] sm:$0xff]
    %v67 = vld [vmem:[#allocation2 + $0x8] sm:$0xff]
    %v68 = vld [vmem:[#allocation2 + $0x10] sm:$0xff]
    %v69 = vld [vmem:[#allocation2 + $0x18] sm:$0xff]
    %v70 = vld [vmem:[#allocation2 + $0x20] sm:$0xff]
    %v71 = vld [vmem:[#allocation2 + $0x28] sm:$0xff]
    %v72 = vld [vmem:[#allocation2 + $0x30] sm:$0xff]
    %v73 = vld [vmem:[#allocation2 + $0x38] sm:$0xff]
    %v74 = vld [vmem:[#allocation2 + $0x40] sm:$0xff]
    %v75 = vld [vmem:[#allocation2 + $0x48] sm:$0xff]
    %v76 = vld [vmem:[#allocation2 + $0x50] sm:$0xff]
    %v77 = vld [vmem:[#allocation2 + $0x58] sm:$0xff]
    %v78 = vld [vmem:[#allocation2 + $0x60] sm:$0xff]
    %v79 = vld [vmem:[#allocation2 + $0x68] sm:$0xff]
    %v80 = vld [vmem:[#allocation2 + $0x70] sm:$0xff]
    %v81 = vld [vmem:[#allocation2 + $0x78] sm:$0xff]
    %v82 = vld [vmem:[#allocation5] sm:$0x1]
    %v83 = vld [vmem:[%s2] sm:$0x1]
    %84 = vadd.xlane.f32.xlu0 %v66
    %v85 = vpop.xlane.xlu0 %84
    %86 = vadd.xlane.f32.xlu0 %v67
    %v87 = vpop.xlane.xlu0 %86
    %88 = vadd.xlane.f32.xlu0 %v68
    %v89 = vpop.xlane.xlu0 %88
    %90 = vadd.xlane.f32.xlu0 %v69
    %v91 = vpop.xlane.xlu0 %90
    %92 = vadd.xlane.f32.xlu0 %v70
    %v93 = vpop.xlane.xlu0 %92
    %94 = vadd.xlane.f32.xlu0 %v71
    %v95 = vpop.xlane.xlu0 %94
    %96 = vadd.xlane.f32.xlu0 %v72
    %v97 = vpop.xlane.xlu0 %96
    %98 = vadd.xlane.f32.xlu0 %v73
    %v99 = vpop.xlane.xlu0 %98
    %100 = vadd.xlane.f32.xlu0 %v74
    %v101 = vpop.xlane.xlu0 %100
    %102 = vadd.xlane.f32.xlu0 %v75
    %v103 = vpop.xlane.xlu0 %102
    %104 = vadd.xlane.f32.xlu0 %v76
    %v105 = vpop.xlane.xlu0 %104
    %106 = vadd.xlane.f32.xlu0 %v77
    %v107 = vpop.xlane.xlu0 %106
    %108 = vadd.xlane.f32.xlu0 %v78
    %v109 = vpop.xlane.xlu0 %108
    %110 = vadd.xlane.f32.xlu0 %v79
    %v111 = vpop.xlane.xlu0 %110
    %112 = vadd.xlane.f32.xlu0 %v80
    %v113 = vpop.xlane.xlu0 %112
    %114 = vadd.xlane.f32.xlu0 %v81
    %v115 = vpop.xlane.xlu0 %114
    %v116 = vrcp.pop 128.0
    %v117 = vmul.f32 128.0, %v116
    %v118 = vsub.f32 1.0, %v117
    %v119 = vmul.f32 %v116, %v118
    %v120 = vadd.f32 %v116, %v119
    %vm121 = vweird.f32 %v116
    %v122 = vsel %vm121, %v116, %v120
    %v123 = vmul.f32 %v85, %v122
    %v124 = vmul.f32 %v87, %v122
    %v125 = vmul.f32 %v89, %v122
    %v126 = vmul.f32 %v91, %v122
    %v127 = vmul.f32 %v93, %v122
    %v128 = vmul.f32 %v95, %v122
    %v129 = vmul.f32 %v97, %v122
    %v130 = vmul.f32 %v99, %v122
    %v131 = vmul.f32 %v101, %v122
    %v132 = vmul.f32 %v103, %v122
    %v133 = vmul.f32 %v105, %v122
    %v134 = vmul.f32 %v107, %v122
    %v135 = vmul.f32 %v109, %v122
    %v136 = vmul.f32 %v111, %v122
    %v137 = vmul.f32 %v113, %v122
    %v138 = vmul.f32 %v115, %v122
    %v139 = vmul.f32 %v66, %v66
    %v140 = vmul.f32 %v67, %v67
    %v141 = vmul.f32 %v68, %v68
    %v142 = vmul.f32 %v69, %v69
    %v143 = vmul.f32 %v70, %v70
    %v144 = vmul.f32 %v71, %v71
    %v145 = vmul.f32 %v72, %v72
    %v146 = vmul.f32 %v73, %v73
    %v147 = vmul.f32 %v74, %v74
    %v148 = vmul.f32 %v75, %v75
    %v149 = vmul.f32 %v76, %v76
    %v150 = vmul.f32 %v77, %v77
    %v151 = vmul.f32 %v78, %v78
    %v152 = vmul.f32 %v79, %v79
    %v153 = vmul.f32 %v80, %v80
    %v154 = vmul.f32 %v81, %v81
    %155 = vadd.xlane.f32.xlu0 %v139
    %v156 = vpop.xlane.xlu0 %155
    %157 = vadd.xlane.f32.xlu0 %v140
    %v158 = vpop.xlane.xlu0 %157
    %159 = vadd.xlane.f32.xlu0 %v141
    %v160 = vpop.xlane.xlu0 %159
    %161 = vadd.xlane.f32.xlu0 %v142
    %v162 = vpop.xlane.xlu0 %161
    %163 = vadd.xlane.f32.xlu0 %v143
    %v164 = vpop.xlane.xlu0 %163
    %165 = vadd.xlane.f32.xlu0 %v144
    %v166 = vpop.xlane.xlu0 %165
    %167 = vadd.xlane.f32.xlu0 %v145
    %v168 = vpop.xlane.xlu0 %167
    %169 = vadd.xlane.f32.xlu0 %v146
    %v170 = vpop.xlane.xlu0 %169
    %171 = vadd.xlane.f32.xlu0 %v147
    %v172 = vpop.xlane.xlu0 %171
    %173 = vadd.xlane.f32.xlu0 %v148
    %v174 = vpop.xlane.xlu0 %173
    %175 = vadd.xlane.f32.xlu0 %v149
    %v176 = vpop.xlane.xlu0 %175
    %177 = vadd.xlane.f32.xlu0 %v150
    %v178 = vpop.xlane.xlu0 %177
    %179 = vadd.xlane.f32.xlu0 %v151
    %v180 = vpop.xlane.xlu0 %179
    %181 = vadd.xlane.f32.xlu0 %v152
    %v182 = vpop.xlane.xlu0 %181
    %183 = vadd.xlane.f32.xlu0 %v153
    %v184 = vpop.xlane.xlu0 %183
    %185 = vadd.xlane.f32.xlu0 %v154
    %v186 = vpop.xlane.xlu0 %185
    %v187 = vmul.f32 %v156, %v122
    %v188 = vmul.f32 %v158, %v122
    %v189 = vmul.f32 %v160, %v122
    %v190 = vmul.f32 %v162, %v122
    %v191 = vmul.f32 %v164, %v122
    %v192 = vmul.f32 %v166, %v122
    %v193 = vmul.f32 %v168, %v122
    %v194 = vmul.f32 %v170, %v122
    %v195 = vmul.f32 %v172, %v122
    %v196 = vmul.f32 %v174, %v122
    %v197 = vmul.f32 %v176, %v122
    %v198 = vmul.f32 %v178, %v122
    %v199 = vmul.f32 %v180, %v122
    %v200 = vmul.f32 %v182, %v122
    %v201 = vmul.f32 %v184, %v122
    %v202 = vmul.f32 %v186, %v122
    %v203 = vmul.f32 %v123, %v123
    %v204 = vmul.f32 %v124, %v124
    %v205 = vmul.f32 %v125, %v125
    %v206 = vmul.f32 %v126, %v126
    %v207 = vmul.f32 %v127, %v127
    %v208 = vmul.f32 %v128, %v128
    %v209 = vmul.f32 %v129, %v129
    %v210 = vmul.f32 %v130, %v130
    %v211 = vmul.f32 %v131, %v131
    %v212 = vmul.f32 %v132, %v132
    %v213 = vmul.f32 %v133, %v133
    %v214 = vmul.f32 %v134, %v134
    %v215 = vmul.f32 %v135, %v135
    %v216 = vmul.f32 %v136, %v136
    %v217 = vmul.f32 %v137, %v137
    %v218 = vmul.f32 %v138, %v138
    %v219 = vsub.f32 %v187, %v203
    %v220 = vsub.f32 %v188, %v204
    %v221 = vsub.f32 %v189, %v205
    %v222 = vsub.f32 %v190, %v206
    %v223 = vsub.f32 %v191, %v207
    %v224 = vsub.f32 %v192, %v208
    %v225 = vsub.f32 %v193, %v209
    %v226 = vsub.f32 %v194, %v210
    %v227 = vsub.f32 %v195, %v211
    %v228 = vsub.f32 %v196, %v212
    %v229 = vsub.f32 %v197, %v213
    %v230 = vsub.f32 %v198, %v214
    %v231 = vsub.f32 %v199, %v215
    %v232 = vsub.f32 %v200, %v216
    %v233 = vsub.f32 %v201, %v217
    %v234 = vsub.f32 %v202, %v218
    %v235 = vmax.f32 %v219, 0.0
    %v236 = vmax.f32 %v220, 0.0
    %v237 = vmax.f32 %v221, 0.0
    %v238 = vmax.f32 %v222, 0.0
    %v239 = vmax.f32 %v223, 0.0
    %v240 = vmax.f32 %v224, 0.0
    %v241 = vmax.f32 %v225, 0.0
    %v242 = vmax.f32 %v226, 0.0
    %v243 = vmax.f32 %v227, 0.0
    %v244 = vmax.f32 %v228, 0.0
    %v245 = vmax.f32 %v229, 0.0
    %v246 = vmax.f32 %v230, 0.0
    %v247 = vmax.f32 %v231, 0.0
    %v248 = vmax.f32 %v232, 0.0
    %v249 = vmax.f32 %v233, 0.0
    %v250 = vmax.f32 %v234, 0.0
    %v251 = vsub.f32 %v66, %v123
    %v252 = vsub.f32 %v67, %v124
    %v253 = vsub.f32 %v68, %v125
    %v254 = vsub.f32 %v69, %v126
    %v255 = vsub.f32 %v70, %v127
    %v256 = vsub.f32 %v71, %v128
    %v257 = vsub.f32 %v72, %v129
    %v258 = vsub.f32 %v73, %v130
    %v259 = vsub.f32 %v74, %v131
    %v260 = vsub.f32 %v75, %v132
    %v261 = vsub.f32 %v76, %v133
    %v262 = vsub.f32 %v77, %v134
    %v263 = vsub.f32 %v78, %v135
    %v264 = vsub.f32 %v79, %v136
    %v265 = vsub.f32 %v80, %v137
    %v266 = vsub.f32 %v81, %v138
    %v267 = vadd.f32 %v235, 1e-05
    %v268 = vadd.f32 %v236, 1e-05
    %v269 = vadd.f32 %v237, 1e-05
    %v270 = vadd.f32 %v238, 1e-05
    %v271 = vadd.f32 %v239, 1e-05
    %v272 = vadd.f32 %v240, 1e-05
    %v273 = vadd.f32 %v241, 1e-05
    %v274 = vadd.f32 %v242, 1e-05
    %v275 = vadd.f32 %v243, 1e-05
    %v276 = vadd.f32 %v244, 1e-05
    %v277 = vadd.f32 %v245, 1e-05
    %v278 = vadd.f32 %v246, 1e-05
    %v279 = vadd.f32 %v247, 1e-05
    %v280 = vadd.f32 %v248, 1e-05
    %v281 = vadd.f32 %v249, 1e-05
    %v282 = vadd.f32 %v250, 1e-05
    %v283 = vrsqrt.pop %v267
    %v284 = vmul.f32 %v283, %v267
    %v285 = vmul.f32 %v284, %v283
    %v286 = vmul.f32 0.5, %v285
    %v287 = vsub.f32 1.5, %v286
    %v288 = vmul.f32 %v283, %v287
    %vm289 = vweird.f32 %v267
    %vm290 = vweird.f32 %v283
    %vm291 = vmor %vm289, %vm290
    %v292 = vsel %vm291, %v283, %v288
    %v293 = vrsqrt.pop %v268
    %v294 = vmul.f32 %v293, %v268
    %v295 = vmul.f32 %v294, %v293
    %v296 = vmul.f32 0.5, %v295
    %v297 = vsub.f32 1.5, %v296
    %v298 = vmul.f32 %v293, %v297
    %vm299 = vweird.f32 %v268
    %vm300 = vweird.f32 %v293
    %vm301 = vmor %vm299, %vm300
    %v302 = vsel %vm301, %v293, %v298
    %v303 = vrsqrt.pop %v269
    %v304 = vmul.f32 %v303, %v269
    %v305 = vmul.f32 %v304, %v303
    %v306 = vmul.f32 0.5, %v305
    %v307 = vsub.f32 1.5, %v306
    %v308 = vmul.f32 %v303, %v307
    %vm309 = vweird.f32 %v269
    %vm310 = vweird.f32 %v303
    %vm311 = vmor %vm309, %vm310
    %v312 = vsel %vm311, %v303, %v308
    %v313 = vrsqrt.pop %v270
    %v314 = vmul.f32 %v313, %v270
    %v315 = vmul.f32 %v314, %v313
    %v316 = vmul.f32 0.5, %v315
    %v317 = vsub.f32 1.5, %v316
    %v318 = vmul.f32 %v313, %v317
    %vm319 = vweird.f32 %v270
    %vm320 = vweird.f32 %v313
    %vm321 = vmor %vm319, %vm320
    %v322 = vsel %vm321, %v313, %v318
    %v323 = vrsqrt.pop %v271
    %v324 = vmul.f32 %v323, %v271
    %v325 = vmul.f32 %v324, %v323
    %v326 = vmul.f32 0.5, %v325
    %v327 = vsub.f32 1.5, %v326
    %v328 = vmul.f32 %v323, %v327
    %vm329 = vweird.f32 %v271
    %vm330 = vweird.f32 %v323
    %vm331 = vmor %vm329, %vm330
    %v332 = vsel %vm331, %v323, %v328
    %v333 = vrsqrt.pop %v272
    %v334 = vmul.f32 %v333, %v272
    %v335 = vmul.f32 %v334, %v333
    %v336 = vmul.f32 0.5, %v335
    %v337 = vsub.f32 1.5, %v336
    %v338 = vmul.f32 %v333, %v337
    %vm339 = vweird.f32 %v272
    %vm340 = vweird.f32 %v333
    %vm341 = vmor %vm339, %vm340
    %v342 = vsel %vm341, %v333, %v338
    %v343 = vrsqrt.pop %v273
    %v344 = vmul.f32 %v343, %v273
    %v345 = vmul.f32 %v344, %v343
    %v346 = vmul.f32 0.5, %v345
    %v347 = vsub.f32 1.5, %v346
    %v348 = vmul.f32 %v343, %v347
    %vm349 = vweird.f32 %v273
    %vm350 = vweird.f32 %v343
    %vm351 = vmor %vm349, %vm350
    %v352 = vsel %vm351, %v343, %v348
    %v353 = vrsqrt.pop %v274
    %v354 = vmul.f32 %v353, %v274
    %v355 = vmul.f32 %v354, %v353
    %v356 = vmul.f32 0.5, %v355
    %v357 = vsub.f32 1.5, %v356
    %v358 = vmul.f32 %v353, %v357
    %vm359 = vweird.f32 %v274
    %vm360 = vweird.f32 %v353
    %vm361 = vmor %vm359, %vm360
    %v362 = vsel %vm361, %v353, %v358
    %v363 = vrsqrt.pop %v275
    %v364 = vmul.f32 %v363, %v275
    %v365 = vmul.f32 %v364, %v363
    %v366 = vmul.f32 0.5, %v365
    %v367 = vsub.f32 1.5, %v366
    %v368 = vmul.f32 %v363, %v367
    %vm369 = vweird.f32 %v275
    %vm370 = vweird.f32 %v363
    %vm371 = vmor %vm369, %vm370
    %v372 = vsel %vm371, %v363, %v368
    %v373 = vrsqrt.pop %v276
    %v374 = vmul.f32 %v373, %v276
    %v375 = vmul.f32 %v374, %v373
    %v376 = vmul.f32 0.5, %v375
    %v377 = vsub.f32 1.5, %v376
    %v378 = vmul.f32 %v373, %v377
    %vm379 = vweird.f32 %v276
    %vm380 = vweird.f32 %v373
    %vm381 = vmor %vm379, %vm380
    %v382 = vsel %vm381, %v373, %v378
    %v383 = vrsqrt.pop %v277
    %v384 = vmul.f32 %v383, %v277
    %v385 = vmul.f32 %v384, %v383
    %v386 = vmul.f32 0.5, %v385
    %v387 = vsub.f32 1.5, %v386
    %v388 = vmul.f32 %v383, %v387
    %vm389 = vweird.f32 %v277
    %vm390 = vweird.f32 %v383
    %vm391 = vmor %vm389, %vm390
    %v392 = vsel %vm391, %v383, %v388
    %v393 = vrsqrt.pop %v278
    %v394 = vmul.f32 %v393, %v278
    %v395 = vmul.f32 %v394, %v393
    %v396 = vmul.f32 0.5, %v395
    %v397 = vsub.f32 1.5, %v396
    %v398 = vmul.f32 %v393, %v397
    %vm399 = vweird.f32 %v278
    %vm400 = vweird.f32 %v393
    %vm401 = vmor %vm399, %vm400
    %v402 = vsel %vm401, %v393, %v398
    %v403 = vrsqrt.pop %v279
    %v404 = vmul.f32 %v403, %v279
    %v405 = vmul.f32 %v404, %v403
    %v406 = vmul.f32 0.5, %v405
    %v407 = vsub.f32 1.5, %v406
    %v408 = vmul.f32 %v403, %v407
    %vm409 = vweird.f32 %v279
    %vm410 = vweird.f32 %v403
    %vm411 = vmor %vm409, %vm410
    %v412 = vsel %vm411, %v403, %v408
    %v413 = vrsqrt.pop %v280
    %v414 = vmul.f32 %v413, %v280
    %v415 = vmul.f32 %v414, %v413
    %v416 = vmul.f32 0.5, %v415
    %v417 = vsub.f32 1.5, %v416
    %v418 = vmul.f32 %v413, %v417
    %vm419 = vweird.f32 %v280
    %vm420 = vweird.f32 %v413
    %vm421 = vmor %vm419, %vm420
    %v422 = vsel %vm421, %v413, %v418
    %v423 = vrsqrt.pop %v281
    %v424 = vmul.f32 %v423, %v281
    %v425 = vmul.f32 %v424, %v423
    %v426 = vmul.f32 0.5, %v425
    %v427 = vsub.f32 1.5, %v426
    %v428 = vmul.f32 %v423, %v427
    %vm429 = vweird.f32 %v281
    %vm430 = vweird.f32 %v423
    %vm431 = vmor %vm429, %vm430
    %v432 = vsel %vm431, %v423, %v428
    %v433 = vrsqrt.pop %v282
    %v434 = vmul.f32 %v433, %v282
    %v435 = vmul.f32 %v434, %v433
    %v436 = vmul.f32 0.5, %v435
    %v437 = vsub.f32 1.5, %v436
    %v438 = vmul.f32 %v433, %v437
    %vm439 = vweird.f32 %v282
    %vm440 = vweird.f32 %v433
    %vm441 = vmor %vm439, %vm440
    %v442 = vsel %vm441, %v433, %v438
    %v443 = vmul.f32 %v251, %v292
    %v444 = vmul.f32 %v252, %v302
    %v445 = vmul.f32 %v253, %v312
    %v446 = vmul.f32 %v254, %v322
    %v447 = vmul.f32 %v255, %v332
    %v448 = vmul.f32 %v256, %v342
    %v449 = vmul.f32 %v257, %v352
    %v450 = vmul.f32 %v258, %v362
    %v451 = vmul.f32 %v259, %v372
    %v452 = vmul.f32 %v260, %v382
    %v453 = vmul.f32 %v261, %v392
    %v454 = vmul.f32 %v262, %v402
    %v455 = vmul.f32 %v263, %v412
    %v456 = vmul.f32 %v264, %v422
    %v457 = vmul.f32 %v265, %v432
    %v458 = vmul.f32 %v266, %v442
    %v460 = vperm.slane %v82, 0
    %v462 = vmul.f32 %v443, %v460
    %v463 = vmul.f32 %v444, %v460
    %v464 = vmul.f32 %v445, %v460
    %v465 = vmul.f32 %v446, %v460
    %v466 = vmul.f32 %v447, %v460
    %v467 = vmul.f32 %v448, %v460
    %v468 = vmul.f32 %v449, %v460
    %v469 = vmul.f32 %v450, %v460
    %v470 = vmul.f32 %v451, %v460
    %v471 = vmul.f32 %v452, %v460
    %v472 = vmul.f32 %v453, %v460
    %v473 = vmul.f32 %v454, %v460
    %v474 = vmul.f32 %v455, %v460
    %v475 = vmul.f32 %v456, %v460
    %v476 = vmul.f32 %v457, %v460
    %v477 = vmul.f32 %v458, %v460
    %v479 = vperm.slane %v83, 0
    %v481 = vadd.f32 %v462, %v479
    %v482 = vadd.f32 %v463, %v479
    %v483 = vadd.f32 %v464, %v479
    %v484 = vadd.f32 %v465, %v479
    %v485 = vadd.f32 %v466, %v479
    %v486 = vadd.f32 %v467, %v479
    %v487 = vadd.f32 %v468, %v479
    %v488 = vadd.f32 %v469, %v479
    %v489 = vadd.f32 %v470, %v479
    %v490 = vadd.f32 %v471, %v479
    %v491 = vadd.f32 %v472, %v479
    %v492 = vadd.f32 %v473, %v479
    %v493 = vadd.f32 %v474, %v479
    %v494 = vadd.f32 %v475, %v479
    %v495 = vadd.f32 %v476, %v479
    %v496 = vadd.f32 %v477, %v479
    %v497 = vld [vmem:[#allocation7] sm:$0xff]
    %v498 = vld [vmem:[#allocation7 + $0x8] sm:$0xff]
    %v499 = vld [vmem:[#allocation7 + $0x10] sm:$0xff]
    %v500 = vld [vmem:[#allocation7 + $0x18] sm:$0xff]
    %v501 = vld [vmem:[#allocation7 + $0x20] sm:$0xff]
    %v502 = vld [vmem:[#allocation7 + $0x28] sm:$0xff]
    %v503 = vld [vmem:[#allocation7 + $0x30] sm:$0xff]
    %v504 = vld [vmem:[#allocation7 + $0x38] sm:$0xff]
    %v505 = vld [vmem:[#allocation7 + $0x40] sm:$0xff]
    %v506 = vld [vmem:[#allocation7 + $0x48] sm:$0xff]
    %v507 = vld [vmem:[#allocation7 + $0x50] sm:$0xff]
    %v508 = vld [vmem:[#allocation7 + $0x58] sm:$0xff]
    %v509 = vld [vmem:[#allocation7 + $0x60] sm:$0xff]
    %v510 = vld [vmem:[#allocation7 + $0x68] sm:$0xff]
    %v511 = vld [vmem:[#allocation7 + $0x70] sm:$0xff]
    %v512 = vld [vmem:[#allocation7 + $0x78] sm:$0xff]
    %v513 = vld [vmem:[#allocation7 + $0x80] sm:$0xff]
    %v514 = vld [vmem:[#allocation7 + $0x88] sm:$0xff]
    %v515 = vld [vmem:[#allocation7 + $0x90] sm:$0xff]
    %v516 = vld [vmem:[#allocation7 + $0x98] sm:$0xff]
    %v517 = vld [vmem:[#allocation7 + $0xa0] sm:$0xff]
    %v518 = vld [vmem:[#allocation7 + $0xa8] sm:$0xff]
    %v519 = vld [vmem:[#allocation7 + $0xb0] sm:$0xff]
    %v520 = vld [vmem:[#allocation7 + $0xb8] sm:$0xff]
    %v521 = vld [vmem:[#allocation7 + $0xc0] sm:$0xff]
    %v522 = vld [vmem:[#allocation7 + $0xc8] sm:$0xff]
    %v523 = vld [vmem:[#allocation7 + $0xd0] sm:$0xff]
    %v524 = vld [vmem:[#allocation7 + $0xd8] sm:$0xff]
    %v525 = vld [vmem:[#allocation7 + $0xe0] sm:$0xff]
    %v526 = vld [vmem:[#allocation7 + $0xe8] sm:$0xff]
    %v527 = vld [vmem:[#allocation7 + $0xf0] sm:$0xff]
    %v528 = vld [vmem:[#allocation7 + $0xf8] sm:$0xff]
    %v529 = vld [vmem:[%s4] sm:$0x3]
    %v531 = vperm.slane %v529, 0
    %v532 = vperm.slane %v529, 1
    %535 = vmatpush.msra.mxu0 %v527
    %536 = vmatpush.msra.mxu0 %v525
    %537 = vmatpush.msra.mxu0 %v523
    %538 = vmatpush.msra.mxu0 %v521
    %539 = vmatpush.msra.mxu0 %v519
    %540 = vmatpush.msra.mxu0 %v517
    %541 = vmatpush.msra.mxu0 %v515
    %542 = vmatpush.msra.mxu0 %v513
    %543 = vmatpush.msra.mxu0 %v511
    %544 = vmatpush.msra.mxu0 %v509
    %545 = vmatpush.msra.mxu0 %v507
    %546 = vmatpush.msra.mxu0 %v505
    %547 = vmatpush.msra.mxu0 %v503
    %548 = vmatpush.msra.mxu0 %v501
    %549 = vmatpush.msra.mxu0 %v499
    %550 = vmatpush.msra.mxu0 %v497
    %551 = vmatmul.f32.gmra.mxu0 %v481
    %v552 = vpop.f32.mrf.mxu0
    %v553 = vadd.f32 %v531, %v552
    %554 = vmatmul.f32.gmra.mxu0 %v482
    %v555 = vpop.f32.mrf.mxu0
    %v556 = vadd.f32 %v531, %v555
    %557 = vmatmul.f32.gmra.mxu0 %v483
    %v558 = vpop.f32.mrf.mxu0
    %v559 = vadd.f32 %v531, %v558
    %560 = vmatmul.f32.gmra.mxu0 %v484
    %v561 = vpop.f32.mrf.mxu0
    %v562 = vadd.f32 %v531, %v561
    %563 = vmatmul.f32.gmra.mxu0 %v485
    %v564 = vpop.f32.mrf.mxu0
    %v565 = vadd.f32 %v531, %v564
    %566 = vmatmul.f32.gmra.mxu0 %v486
    %v567 = vpop.f32.mrf.mxu0
    %v568 = vadd.f32 %v531, %v567
    %569 = vmatmul.f32.gmra.mxu0 %v487
    %v570 = vpop.f32.mrf.mxu0
    %v571 = vadd.f32 %v531, %v570
    %572 = vmatmul.f32.gmra.mxu0 %v488
    %v573 = vpop.f32.mrf.mxu0
    %v574 = vadd.f32 %v531, %v573
    %575 = vmatmul.f32.gmra.mxu0 %v489
    %v576 = vpop.f32.mrf.mxu0
    %v577 = vadd.f32 %v531, %v576
    %578 = vmatmul.f32.gmra.mxu0 %v490
    %v579 = vpop.f32.mrf.mxu0
    %v580 = vadd.f32 %v531, %v579
    %581 = vmatmul.f32.gmra.mxu0 %v491
    %v582 = vpop.f32.mrf.mxu0
    %v583 = vadd.f32 %v531, %v582
    %584 = vmatmul.f32.gmra.mxu0 %v492
    %v585 = vpop.f32.mrf.mxu0
    %v586 = vadd.f32 %v531, %v585
    %587 = vmatmul.f32.gmra.mxu0 %v493
    %v588 = vpop.f32.mrf.mxu0
    %v589 = vadd.f32 %v531, %v588
    %590 = vmatmul.f32.gmra.mxu0 %v494
    %v591 = vpop.f32.mrf.mxu0
    %v592 = vadd.f32 %v531, %v591
    %593 = vmatmul.f32.gmra.mxu0 %v495
    %v594 = vpop.f32.mrf.mxu0
    %v595 = vadd.f32 %v531, %v594
    %596 = vmatmul.f32.gmra.mxu0 %v496
    %v597 = vpop.f32.mrf.mxu0
    %v598 = vadd.f32 %v531, %v597
    %599 = vdwg.mxu0
    %600 = vmatpush.msra.mxu0 %v528
    %601 = vmatpush.msra.mxu0 %v526
    %602 = vmatpush.msra.mxu0 %v524
    %603 = vmatpush.msra.mxu0 %v522
    %604 = vmatpush.msra.mxu0 %v520
    %605 = vmatpush.msra.mxu0 %v518
    %606 = vmatpush.msra.mxu0 %v516
    %607 = vmatpush.msra.mxu0 %v514
    %608 = vmatpush.msra.mxu0 %v512
    %609 = vmatpush.msra.mxu0 %v510
    %610 = vmatpush.msra.mxu0 %v508
    %611 = vmatpush.msra.mxu0 %v506
    %612 = vmatpush.msra.mxu0 %v504
    %613 = vmatpush.msra.mxu0 %v502
    %614 = vmatpush.msra.mxu0 %v500
    %615 = vmatpush.msra.mxu0 %v498
    %616 = vmatmul.f32.gmra.mxu0 %v481
    %v617 = vpop.f32.mrf.mxu0
    %v618 = vadd.f32 %v532, %v617
    %619 = vmatmul.f32.gmra.mxu0 %v482
    %v620 = vpop.f32.mrf.mxu0
    %v621 = vadd.f32 %v532, %v620
    %622 = vmatmul.f32.gmra.mxu0 %v483
    %v623 = vpop.f32.mrf.mxu0
    %v624 = vadd.f32 %v532, %v623
    %625 = vmatmul.f32.gmra.mxu0 %v484
    %v626 = vpop.f32.mrf.mxu0
    %v627 = vadd.f32 %v532, %v626
    %628 = vmatmul.f32.gmra.mxu0 %v485
    %v629 = vpop.f32.mrf.mxu0
    %v630 = vadd.f32 %v532, %v629
    %631 = vmatmul.f32.gmra.mxu0 %v486
    %v632 = vpop.f32.mrf.mxu0
    %v633 = vadd.f32 %v532, %v632
    %634 = vmatmul.f32.gmra.mxu0 %v487
    %v635 = vpop.f32.mrf.mxu0
    %v636 = vadd.f32 %v532, %v635
    %637 = vmatmul.f32.gmra.mxu0 %v488
    %v638 = vpop.f32.mrf.mxu0
    %v639 = vadd.f32 %v532, %v638
    %640 = vmatmul.f32.gmra.mxu0 %v489
    %v641 = vpop.f32.mrf.mxu0
    %v642 = vadd.f32 %v532, %v641
    %643 = vmatmul.f32.gmra.mxu0 %v490
    %v644 = vpop.f32.mrf.mxu0
    %v645 = vadd.f32 %v532, %v644
    %646 = vmatmul.f32.gmra.mxu0 %v491
    %v647 = vpop.f32.mrf.mxu0
    %v648 = vadd.f32 %v532, %v647
    %649 = vmatmul.f32.gmra.mxu0 %v492
    %v650 = vpop.f32.mrf.mxu0
    %v651 = vadd.f32 %v532, %v650
    %652 = vmatmul.f32.gmra.mxu0 %v493
    %v653 = vpop.f32.mrf.mxu0
    %v654 = vadd.f32 %v532, %v653
    %655 = vmatmul.f32.gmra.mxu0 %v494
    %v656 = vpop.f32.mrf.mxu0
    %v657 = vadd.f32 %v532, %v656
    %658 = vmatmul.f32.gmra.mxu0 %v495
    %v659 = vpop.f32.mrf.mxu0
    %v660 = vadd.f32 %v532, %v659
    %661 = vmatmul.f32.gmra.mxu0 %v496
    %v662 = vpop.f32.mrf.mxu0
    %v663 = vadd.f32 %v532, %v662
    %664 = vdwg.mxu0
    %665 = vst [vmem:[#allocation8] sm:$0xff] %v553
    %666 = vst [vmem:[#allocation8 + $0x8] sm:$0xff] %v618
    %667 = vst [vmem:[#allocation8 + $0x10] sm:$0xff] %v556
    %668 = vst [vmem:[#allocation8 + $0x18] sm:$0xff] %v621
    %669 = vst [vmem:[#allocation8 + $0x20] sm:$0xff] %v559
    %670 = vst [vmem:[#allocation8 + $0x28] sm:$0xff] %v624
    %671 = vst [vmem:[#allocation8 + $0x30] sm:$0xff] %v562
    %672 = vst [vmem:[#allocation8 + $0x38] sm:$0xff] %v627
    %673 = vst [vmem:[#allocation8 + $0x40] sm:$0xff] %v565
    %674 = vst [vmem:[#allocation8 + $0x48] sm:$0xff] %v630
    %675 = vst [vmem:[#allocation8 + $0x50] sm:$0xff] %v568
    %676 = vst [vmem:[#allocation8 + $0x58] sm:$0xff] %v633
    %677 = vst [vmem:[#allocation8 + $0x60] sm:$0xff] %v571
    %678 = vst [vmem:[#allocation8 + $0x68] sm:$0xff] %v636
    %679 = vst [vmem:[#allocation8 + $0x70] sm:$0xff] %v574
    %680 = vst [vmem:[#allocation8 + $0x78] sm:$0xff] %v639
    %681 = vst [vmem:[#allocation8 + $0x80] sm:$0xff] %v577
    %682 = vst [vmem:[#allocation8 + $0x88] sm:$0xff] %v642
    %683 = vst [vmem:[#allocation8 + $0x90] sm:$0xff] %v580
    %684 = vst [vmem:[#allocation8 + $0x98] sm:$0xff] %v645
    %685 = vst [vmem:[#allocation8 + $0xa0] sm:$0xff] %v583
    %686 = vst [vmem:[#allocation8 + $0xa8] sm:$0xff] %v648
    %687 = vst [vmem:[#allocation8 + $0xb0] sm:$0xff] %v586
    %688 = vst [vmem:[#allocation8 + $0xb8] sm:$0xff] %v651
    %689 = vst [vmem:[#allocation8 + $0xc0] sm:$0xff] %v589
    %690 = vst [vmem:[#allocation8 + $0xc8] sm:$0xff] %v654
    %691 = vst [vmem:[#allocation8 + $0xd0] sm:$0xff] %v592
    %692 = vst [vmem:[#allocation8 + $0xd8] sm:$0xff] %v657
    %693 = vst [vmem:[#allocation8 + $0xe0] sm:$0xff] %v595
    %694 = vst [vmem:[#allocation8 + $0xe8] sm:$0xff] %v660
    %695 = vst [vmem:[#allocation8 + $0xf0] sm:$0xff] %v598
    %696 = vst [vmem:[#allocation8 + $0xf8] sm:$0xff] %v663
    // Predicated region
    $region34: #{tpu_custom_call.1} parent=1 // pred_check
      _
    $region35: #{tpu_custom_call.1} parent=1 // pred_check_branch
      %698 = sbr.rel (0) target = $region37
    $region36: #{tpu_custom_call.1} parent=1 // pred_region
      %700 = vsyncadd [#allocation4], 0
      %s701 = sshll.u32 [#allocation8], 4
      %s702 = int_to_ptr.vmem [resolvable:$true] %s701
      %s703 = sshll.u32 %s5, 4
      %s704 = int_to_ptr.hbm [resolvable:$true] %s703
      %709 = dma.vmem_to_hbm [thread:$0]  %s702, 4096, %s704, [#allocation4], 256, 256, 16
    $region37: #{tpu_custom_call.1} parent=1 // pred_fallthru
      _
    // Predicated region
    $region38: #{tpu_custom_call.1} parent=1 // pred_check
      _
    $region39: #{tpu_custom_call.1} parent=1 // pred_check_branch
      %711 = sbr.rel (0) target = $region41
    $region40: #{tpu_custom_call.1} parent=1 // pred_region
      %713 = dma.done [#allocation4], 4096
    $region41: #{tpu_custom_call.1} parent=1 // pred_fallthru
      _
    %714 = vsyncpa [#allocation3], 1
    %715 = vsyncpa [#allocation6], 1
    %716 = vsyncpa [#allocation4], 1

</llo_original>
